<compile_context>
chip_gen: v5e
topology: v5e:2x2
jax: 0.10.0
libtpu: 0.0.40
codegen_flags: <defaults>
</compile_context>

<pallas_src>
import functools

import jax
import jax.numpy as jnp
from jax.experimental import pallas as pl
from jax.experimental.pallas import tpu as pltpu

NEG_SLOPE = 0.2   # DGL GATConv default LeakyReLU negative_slope
NEG_INF = -1e9


# ------------------------------ fused kernel --------------------------------
def _gat_layer(h_in, mask3, w, al_row, ar_row, bias, head_sel, num_heads, f_out):
    """One GAT layer on VMEM-resident values.

    h_in:     (N, C_in)    f32
    mask3:    (H, N, N)    bool  adjacency mask broadcast over heads
    w:        (C_in, H*F)  bf16
    al_row:   (H, 1, H*F)  bf16  attn_l placed in head-h's channel block
    ar_row:   (H, 1, H*F)  bf16
    bias:     (1, H*F)     f32
    head_sel: (H, 1, H*F)  f32   one-hot head selector over channels
    returns:  (N, H*F)     f32
    """
    n = h_in.shape[0]
    hf = num_heads * f_out

    # Shared linear projection for all heads: one lane-dense MXU matmul.
    feat_fc = jnp.dot(h_in.astype(jnp.bfloat16), w,
                      preferred_element_type=jnp.float32)            # (N, H*F)
    fc_b = jnp.broadcast_to(feat_fc.astype(jnp.bfloat16)[None],
                            (num_heads, n, hf))                       # (H, N, H*F)

    # Per-dst / per-src attention logits for all heads at once (batched MXU;
    # replaces 2*H per-head cross-lane XLU reductions and H transposes).
    er = jnp.einsum('hnc,hqc->hnq', fc_b, ar_row,
                    preferred_element_type=jnp.float32)               # (H, N, 1)
    el = jnp.einsum('hqc,hnc->hqn', al_row, fc_b,
                    preferred_element_type=jnp.float32)               # (H, 1, N)

    # e[h, i, j] = LeakyReLU(er[i] + el[j])  — pure VPU broadcasts.
    e = (jnp.broadcast_to(er, (num_heads, n, n)) +
         jnp.broadcast_to(el, (num_heads, n, n)))
    e = jnp.where(e >= 0.0, e, NEG_SLOPE * e)

    # Masked edge-softmax over incoming edges of each destination node.
    e = jnp.where(mask3, e, NEG_INF)
    e_max = jnp.max(e, axis=-1, keepdims=True)
    p = jnp.exp(e - e_max)
    p = jnp.where(mask3, p, 0.0)                    # mask-only semantics
    denom = jnp.maximum(jnp.sum(p, axis=-1, keepdims=True), 1e-9)
    alpha = p * pl.reciprocal(denom, approx=True)                      # (H, N, N)

    # Weighted aggregation (batched MXU). Computes all H*F channels per head and
    # selects each head's own F columns: 4x-redundant tiny matmul in exchange for
    # fully lane-dense ops with zero relayouts / narrow slices.
    rst_wide = jnp.einsum('hij,hjc->hic', alpha.astype(jnp.bfloat16), fc_b,
                          preferred_element_type=jnp.float32)          # (H, N, H*F)
    rst = jnp.sum(rst_wide * head_sel, axis=0)                         # (N, H*F)
    return jax.nn.sigmoid(rst + bias)


def generator_kernel(*refs, num_heads, f_out, num_layers):
    feat_ref, adj_ref, head_sel_ref = refs[:3]
    layer_refs = refs[3:3 + 4 * num_layers]
    fw1_ref, fb1_ref, fw2_ref, fb2_ref = refs[3 + 4 * num_layers:
                                              3 + 4 * num_layers + 4]
    out_ref = refs[-1]

    n = feat_ref.shape[0]
    head_sel = head_sel_ref[...]                                       # hoisted
    # Adjacency mask computed once, reused by every GAT layer (hoisted).
    maskf = adj_ref[...].astype(jnp.float32)
    mask3 = jnp.broadcast_to(maskf[None], (num_heads, n, n)) > 0.0

    h = feat_ref[...]
    for l in range(num_layers):                      # static unrolled (small)
        w = layer_refs[4 * l][...]
        al_row = layer_refs[4 * l + 1][...]
        ar_row = layer_refs[4 * l + 2][...]
        bias = layer_refs[4 * l + 3][...]
        h = _gat_layer(h, mask3, w, al_row, ar_row, bias, head_sel,
                       num_heads, f_out)

    # MLP head: Linear(H*F -> 93) -> ReLU -> Linear(93 -> 93), single slab store.
    hid = jnp.dot(h.astype(jnp.bfloat16), fw1_ref[...],
                  preferred_element_type=jnp.float32) + fb1_ref[...]
    hid = jnp.maximum(hid, 0.0)
    out_ref[...] = jnp.dot(hid.astype(jnp.bfloat16), fw2_ref[...],
                           preferred_element_type=jnp.float32) + fb2_ref[...]


# ------------------------------ wrappers -------------------------------------
def _vmem():
    return pl.BlockSpec(memory_space=pltpu.MemorySpace.VMEM)


def _block_rows(attn, num_heads, f_out):
    """(H, F_out) -> (H, 1, H*F_out): attn[h] placed in head-h's channel block."""
    hf = num_heads * f_out
    c = jnp.arange(hf)
    sel = (c[None, :] // f_out) == jnp.arange(num_heads)[:, None]
    rows = jnp.where(sel, jnp.reshape(attn, (1, hf)), 0.0)
    return rows[:, None, :]


def _head_selector(num_heads, f_out):
    hf = num_heads * f_out
    c = jnp.arange(hf)
    sel = ((c[None, :] // f_out) == jnp.arange(num_heads)[:, None])
    return sel.astype(jnp.float32)[:, None, :]


@functools.partial(jax.jit, static_argnames=("f_out", "num_heads"))
def generator_forward(params, adj, features, *, f_out, num_heads):
    num_layers = len(params["gat"])
    n = features.shape[0]
    out_dim = params["fc"]["w2"].shape[1]

    inputs = [features.astype(jnp.float32),
              adj.astype(jnp.bfloat16),                 # mask-only use -> exact
              _head_selector(num_heads, f_out)]
    for layer in params["gat"]:
        inputs += [
            layer["w"].astype(jnp.bfloat16),
            _block_rows(layer["attn_l"], num_heads, f_out).astype(jnp.bfloat16),
            _block_rows(layer["attn_r"], num_heads, f_out).astype(jnp.bfloat16),
            layer["bias"].astype(jnp.float32),
        ]
    fc = params["fc"]
    inputs += [fc["w1"].astype(jnp.bfloat16), fc["b1"].astype(jnp.float32),
               fc["w2"].astype(jnp.bfloat16), fc["b2"].astype(jnp.float32)]

    kernel = functools.partial(generator_kernel, num_heads=num_heads,
                               f_out=f_out, num_layers=num_layers)
    out = pl.pallas_call(
        kernel,
        out_shape=jax.ShapeDtypeStruct((n, out_dim), jnp.float32),
        in_specs=[_vmem() for _ in inputs],
        out_specs=_vmem(),
    )(*inputs)
    return jnp.squeeze(out)


def init_generator_params(key, f_in, f_out, num_heads, num_layers):
    params = {"gat": [], "fc": {}}
    in_dim = f_in
    for _ in range(num_layers):
        key, k1, k2, k3 = jax.random.split(key, 4)
        params["gat"].append({
            "w": 0.1 * jax.random.normal(k1, (in_dim, num_heads * f_out), jnp.float32),
            "attn_l": 0.1 * jax.random.normal(k2, (num_heads, f_out), jnp.float32),
            "attn_r": 0.1 * jax.random.normal(k3, (num_heads, f_out), jnp.float32),
            "bias": jnp.zeros((1, num_heads * f_out), jnp.float32),
        })
        in_dim = num_heads * f_out
    key, k1, k2 = jax.random.split(key, 3)
    params["fc"] = {
        "w1": 0.1 * jax.random.normal(k1, (num_heads * f_out, 93), jnp.float32),
        "b1": jnp.zeros((1, 93), jnp.float32),
        "w2": 0.1 * jax.random.normal(k2, (93, 93), jnp.float32),
        "b2": jnp.zeros((1, 93), jnp.float32),
    }
    return params


# ----------------------------------- main ------------------------------------
if __name__ == "__main__":
    N = 8            # number of graph nodes
    F_IN = 16
    F_OUT = 8
    NUM_HEADS = 4
    NUM_LAYERS = 2

    key = jax.random.PRNGKey(0)
    key, kf = jax.random.split(key)
    features = jax.random.normal(kf, (N, F_IN), jnp.float32)

    # Deterministic graph: ring + self-loops (every node has >=1 in-edge).
    adj = jnp.zeros((N, N), jnp.float32)
    idx = jnp.arange(N)
    adj = adj.at[idx, idx].set(1.0)                 # self loops
    adj = adj.at[idx, (idx + 1) % N].set(1.0)       # edge (i+1) -> i
    adj = adj.at[idx, (idx - 1) % N].set(1.0)       # edge (i-1) -> i

    params = init_generator_params(key, F_IN, F_OUT, NUM_HEADS, NUM_LAYERS)

    out = generator_forward(params, adj, features, f_out=F_OUT, num_heads=NUM_HEADS)
    out = jax.block_until_ready(out)

    assert out.shape == (N, 93), out.shape
    assert bool(jnp.all(jnp.isfinite(out)))
    print("KERNEL_OK")
</pallas_src>

<mosaic_0001>
module attributes {stable_mosaic.version = 11 : i64} {
  func.func @generator_kernel(%arg0: memref<8x16xf32, #tpu.memory_space<vmem>>, %arg1: memref<8x8xbf16, #tpu.memory_space<vmem>>, %arg2: memref<4x1x32xf32, #tpu.memory_space<vmem>>, %arg3: memref<16x32xbf16, #tpu.memory_space<vmem>>, %arg4: memref<4x1x32xbf16, #tpu.memory_space<vmem>>, %arg5: memref<4x1x32xbf16, #tpu.memory_space<vmem>>, %arg6: memref<1x32xf32, #tpu.memory_space<vmem>>, %arg7: memref<32x32xbf16, #tpu.memory_space<vmem>>, %arg8: memref<4x1x32xbf16, #tpu.memory_space<vmem>>, %arg9: memref<4x1x32xbf16, #tpu.memory_space<vmem>>, %arg10: memref<1x32xf32, #tpu.memory_space<vmem>>, %arg11: memref<32x93xbf16, #tpu.memory_space<vmem>>, %arg12: memref<1x93xf32, #tpu.memory_space<vmem>>, %arg13: memref<93x93xbf16, #tpu.memory_space<vmem>>, %arg14: memref<1x93xf32, #tpu.memory_space<vmem>>, %arg15: memref<8x93xf32, #tpu.memory_space<vmem>>) attributes {dimension_semantics = [], scalar_prefetch = 0 : i64, scratch_operands = 0 : i64, tpu.core_type = #tpu.core_type<tc>} {
    %c0 = arith.constant 0 : index
    %c0_0 = arith.constant 0 : index
    %c0_1 = arith.constant 0 : index
    %0 = vector.load %arg2[%c0, %c0_0, %c0_1] : memref<4x1x32xf32, #tpu.memory_space<vmem>>, vector<4x1x32xf32>
    %c0_2 = arith.constant 0 : index
    %c0_3 = arith.constant 0 : index
    %1 = vector.load %arg1[%c0_2, %c0_3] : memref<8x8xbf16, #tpu.memory_space<vmem>>, vector<8x8xbf16>
    %2 = arith.extf %1 : vector<8x8xbf16> to vector<8x8xf32>
    %3 = vector.shape_cast %2 : vector<8x8xf32> to vector<1x8x8xf32>
    %4 = vector.shape_cast %3 : vector<1x8x8xf32> to vector<1x8x8xf32>
    %5 = vector.broadcast %4 : vector<1x8x8xf32> to vector<4x8x8xf32>
    %cst = arith.constant 0.000000e+00 : f32
    %6 = vector.broadcast %cst : f32 to vector<4x8x8xf32>
    %7 = arith.cmpf ogt, %5, %6 : vector<4x8x8xf32>
    %c0_4 = arith.constant 0 : index
    %c0_5 = arith.constant 0 : index
    %8 = vector.load %arg0[%c0_4, %c0_5] : memref<8x16xf32, #tpu.memory_space<vmem>>, vector<8x16xf32>
    %c0_6 = arith.constant 0 : index
    %c0_7 = arith.constant 0 : index
    %9 = vector.load %arg3[%c0_6, %c0_7] : memref<16x32xbf16, #tpu.memory_space<vmem>>, vector<16x32xbf16>
    %c0_8 = arith.constant 0 : index
    %c0_9 = arith.constant 0 : index
    %c0_10 = arith.constant 0 : index
    %10 = vector.load %arg4[%c0_8, %c0_9, %c0_10] : memref<4x1x32xbf16, #tpu.memory_space<vmem>>, vector<4x1x32xbf16>
    %c0_11 = arith.constant 0 : index
    %c0_12 = arith.constant 0 : index
    %c0_13 = arith.constant 0 : index
    %11 = vector.load %arg5[%c0_11, %c0_12, %c0_13] : memref<4x1x32xbf16, #tpu.memory_space<vmem>>, vector<4x1x32xbf16>
    %c0_14 = arith.constant 0 : index
    %c0_15 = arith.constant 0 : index
    %12 = vector.load %arg6[%c0_14, %c0_15] : memref<1x32xf32, #tpu.memory_space<vmem>>, vector<1x32xf32>
    %13 = arith.truncf %8 : vector<8x16xf32> to vector<8x16xbf16>
    %cst_16 = arith.constant dense<0.000000e+00> : vector<8x32xf32>
    %14 = tpu.matmul %13, %9, %cst_16 {dimension_numbers = #tpu.dot_dimension_numbers<[1], [0], [0], [1], [0, 0, 1, 1], [], []>} : vector<8x16xbf16>, vector<16x32xbf16>, vector<8x32xf32> -> vector<8x32xf32>
    %15 = arith.truncf %14 : vector<8x32xf32> to vector<8x32xbf16>
    %16 = vector.shape_cast %15 : vector<8x32xbf16> to vector<1x8x32xbf16>
    %17 = vector.shape_cast %16 : vector<1x8x32xbf16> to vector<1x8x32xbf16>
    %18 = vector.broadcast %17 : vector<1x8x32xbf16> to vector<4x8x32xbf16>
    "tpu.trace_start"() <{level = 10 : i32, message = "hnc,hqc->hnq"}> : () -> ()
    %cst_17 = arith.constant dense<0.000000e+00> : vector<4x8x1xf32>
    %19 = tpu.matmul %18, %11, %cst_17 {dimension_numbers = #tpu.dot_dimension_numbers<[2], [2], [1], [1], [0, 0, 0, 1, 1, 1], [0], [0]>} : vector<4x8x32xbf16>, vector<4x1x32xbf16>, vector<4x8x1xf32> -> vector<4x8x1xf32>
    "tpu.trace_stop"() : () -> ()
    "tpu.trace_start"() <{level = 10 : i32, message = "hqc,hnc->hqn"}> : () -> ()
    %cst_18 = arith.constant dense<0.000000e+00> : vector<4x1x8xf32>
    %20 = tpu.matmul %10, %18, %cst_18 {dimension_numbers = #tpu.dot_dimension_numbers<[2], [2], [1], [1], [0, 0, 0, 1, 1, 1], [0], [0]>} : vector<4x1x32xbf16>, vector<4x8x32xbf16>, vector<4x1x8xf32> -> vector<4x1x8xf32>
    "tpu.trace_stop"() : () -> ()
    %21 = vector.shape_cast %19 : vector<4x8x1xf32> to vector<4x8x1xf32>
    %22 = vector.broadcast %21 : vector<4x8x1xf32> to vector<4x8x8xf32>
    %23 = vector.shape_cast %20 : vector<4x1x8xf32> to vector<4x1x8xf32>
    %24 = vector.broadcast %23 : vector<4x1x8xf32> to vector<4x8x8xf32>
    %25 = arith.addf %22, %24 : vector<4x8x8xf32>
    %cst_19 = arith.constant 0.000000e+00 : f32
    %26 = vector.broadcast %cst_19 : f32 to vector<4x8x8xf32>
    %27 = arith.cmpf oge, %25, %26 : vector<4x8x8xf32>
    %cst_20 = arith.constant 2.000000e-01 : f32
    %28 = vector.broadcast %cst_20 : f32 to vector<4x8x8xf32>
    %29 = arith.mulf %28, %25 : vector<4x8x8xf32>
    %30 = arith.select %27, %25, %29 : vector<4x8x8xi1>, vector<4x8x8xf32>
    %cst_21 = arith.constant -1.000000e+09 : f32
    %31 = vector.broadcast %cst_21 : f32 to vector<4x8x8xf32>
    %32 = arith.select %7, %30, %31 : vector<4x8x8xi1>, vector<4x8x8xf32>
    %cst_22 = arith.constant dense<0xFF800000> : vector<4x8xf32>
    %33 = vector.multi_reduction <maximumf>, %32, %cst_22 [2] : vector<4x8x8xf32> to vector<4x8xf32>
    %34 = vector.shape_cast %33 : vector<4x8xf32> to vector<4x8x1xf32>
    %35 = vector.broadcast %34 : vector<4x8x1xf32> to vector<4x8x8xf32>
    %36 = arith.subf %32, %35 : vector<4x8x8xf32>
    %37 = math.exp %36 : vector<4x8x8xf32>
    %cst_23 = arith.constant 0.000000e+00 : f32
    %38 = vector.broadcast %cst_23 : f32 to vector<4x8x8xf32>
    %39 = arith.select %7, %37, %38 : vector<4x8x8xi1>, vector<4x8x8xf32>
    %cst_24 = arith.constant dense<0.000000e+00> : vector<4x8xf32>
    %40 = vector.multi_reduction <add>, %39, %cst_24 [2] : vector<4x8x8xf32> to vector<4x8xf32>
    %41 = vector.shape_cast %40 : vector<4x8xf32> to vector<4x8x1xf32>
    %cst_25 = arith.constant 9.99999971E-10 : f32
    %42 = vector.broadcast %cst_25 : f32 to vector<4x8x1xf32>
    %43 = arith.maximumf %41, %42 : vector<4x8x1xf32>
    %44 = tpu.reciprocal %43 {approx = true} : vector<4x8x1xf32> -> vector<4x8x1xf32>
    %45 = vector.broadcast %44 : vector<4x8x1xf32> to vector<4x8x8xf32>
    %46 = arith.mulf %39, %45 : vector<4x8x8xf32>
    %47 = arith.truncf %46 : vector<4x8x8xf32> to vector<4x8x8xbf16>
    "tpu.trace_start"() <{level = 10 : i32, message = "hij,hjc->hic"}> : () -> ()
    %cst_26 = arith.constant dense<0.000000e+00> : vector<4x8x32xf32>
    %48 = tpu.matmul %47, %18, %cst_26 {dimension_numbers = #tpu.dot_dimension_numbers<[2], [1], [1], [2], [0, 0, 0, 1, 1, 2], [0], [0]>} : vector<4x8x8xbf16>, vector<4x8x32xbf16>, vector<4x8x32xf32> -> vector<4x8x32xf32>
    "tpu.trace_stop"() : () -> ()
    %49 = vector.broadcast %0 : vector<4x1x32xf32> to vector<4x8x32xf32>
    %50 = arith.mulf %48, %49 : vector<4x8x32xf32>
    %cst_27 = arith.constant dense<0.000000e+00> : vector<8x32xf32>
    %51 = vector.multi_reduction <add>, %50, %cst_27 [0] : vector<4x8x32xf32> to vector<8x32xf32>
    %52 = vector.broadcast %12 : vector<1x32xf32> to vector<8x32xf32>
    %53 = arith.addf %51, %52 : vector<8x32xf32>
    %54 = arith.negf %53 : vector<8x32xf32>
    %55 = math.exp %54 : vector<8x32xf32>
    %cst_28 = arith.constant 1.000000e+00 : f32
    %56 = vector.broadcast %cst_28 : f32 to vector<8x32xf32>
    %57 = arith.addf %56, %55 : vector<8x32xf32>
    %58 = arith.divf %56, %57 : vector<8x32xf32>
    %c0_29 = arith.constant 0 : index
    %c0_30 = arith.constant 0 : index
    %59 = vector.load %arg7[%c0_29, %c0_30] : memref<32x32xbf16, #tpu.memory_space<vmem>>, vector<32x32xbf16>
    %c0_31 = arith.constant 0 : index
    %c0_32 = arith.constant 0 : index
    %c0_33 = arith.constant 0 : index
    %60 = vector.load %arg8[%c0_31, %c0_32, %c0_33] : memref<4x1x32xbf16, #tpu.memory_space<vmem>>, vector<4x1x32xbf16>
    %c0_34 = arith.constant 0 : index
    %c0_35 = arith.constant 0 : index
    %c0_36 = arith.constant 0 : index
    %61 = vector.load %arg9[%c0_34, %c0_35, %c0_36] : memref<4x1x32xbf16, #tpu.memory_space<vmem>>, vector<4x1x32xbf16>
    %c0_37 = arith.constant 0 : index
    %c0_38 = arith.constant 0 : index
    %62 = vector.load %arg10[%c0_37, %c0_38] : memref<1x32xf32, #tpu.memory_space<vmem>>, vector<1x32xf32>
    %63 = arith.truncf %58 : vector<8x32xf32> to vector<8x32xbf16>
    %cst_39 = arith.constant dense<0.000000e+00> : vector<8x32xf32>
    %64 = tpu.matmul %63, %59, %cst_39 {dimension_numbers = #tpu.dot_dimension_numbers<[1], [0], [0], [1], [0, 0, 1, 1], [], []>} : vector<8x32xbf16>, vector<32x32xbf16>, vector<8x32xf32> -> vector<8x32xf32>
    %65 = arith.truncf %64 : vector<8x32xf32> to vector<8x32xbf16>
    %66 = vector.shape_cast %65 : vector<8x32xbf16> to vector<1x8x32xbf16>
    %67 = vector.shape_cast %66 : vector<1x8x32xbf16> to vector<1x8x32xbf16>
    %68 = vector.broadcast %67 : vector<1x8x32xbf16> to vector<4x8x32xbf16>
    "tpu.trace_start"() <{level = 10 : i32, message = "hnc,hqc->hnq"}> : () -> ()
    %cst_40 = arith.constant dense<0.000000e+00> : vector<4x8x1xf32>
    %69 = tpu.matmul %68, %61, %cst_40 {dimension_numbers = #tpu.dot_dimension_numbers<[2], [2], [1], [1], [0, 0, 0, 1, 1, 1], [0], [0]>} : vector<4x8x32xbf16>, vector<4x1x32xbf16>, vector<4x8x1xf32> -> vector<4x8x1xf32>
    "tpu.trace_stop"() : () -> ()
    "tpu.trace_start"() <{level = 10 : i32, message = "hqc,hnc->hqn"}> : () -> ()
    %cst_41 = arith.constant dense<0.000000e+00> : vector<4x1x8xf32>
    %70 = tpu.matmul %60, %68, %cst_41 {dimension_numbers = #tpu.dot_dimension_numbers<[2], [2], [1], [1], [0, 0, 0, 1, 1, 1], [0], [0]>} : vector<4x1x32xbf16>, vector<4x8x32xbf16>, vector<4x1x8xf32> -> vector<4x1x8xf32>
    "tpu.trace_stop"() : () -> ()
    %71 = vector.shape_cast %69 : vector<4x8x1xf32> to vector<4x8x1xf32>
    %72 = vector.broadcast %71 : vector<4x8x1xf32> to vector<4x8x8xf32>
    %73 = vector.shape_cast %70 : vector<4x1x8xf32> to vector<4x1x8xf32>
    %74 = vector.broadcast %73 : vector<4x1x8xf32> to vector<4x8x8xf32>
    %75 = arith.addf %72, %74 : vector<4x8x8xf32>
    %cst_42 = arith.constant 0.000000e+00 : f32
    %76 = vector.broadcast %cst_42 : f32 to vector<4x8x8xf32>
    %77 = arith.cmpf oge, %75, %76 : vector<4x8x8xf32>
    %cst_43 = arith.constant 2.000000e-01 : f32
    %78 = vector.broadcast %cst_43 : f32 to vector<4x8x8xf32>
    %79 = arith.mulf %78, %75 : vector<4x8x8xf32>
    %80 = arith.select %77, %75, %79 : vector<4x8x8xi1>, vector<4x8x8xf32>
    %cst_44 = arith.constant -1.000000e+09 : f32
    %81 = vector.broadcast %cst_44 : f32 to vector<4x8x8xf32>
    %82 = arith.select %7, %80, %81 : vector<4x8x8xi1>, vector<4x8x8xf32>
    %cst_45 = arith.constant dense<0xFF800000> : vector<4x8xf32>
    %83 = vector.multi_reduction <maximumf>, %82, %cst_45 [2] : vector<4x8x8xf32> to vector<4x8xf32>
    %84 = vector.shape_cast %83 : vector<4x8xf32> to vector<4x8x1xf32>
    %85 = vector.broadcast %84 : vector<4x8x1xf32> to vector<4x8x8xf32>
    %86 = arith.subf %82, %85 : vector<4x8x8xf32>
    %87 = math.exp %86 : vector<4x8x8xf32>
    %cst_46 = arith.constant 0.000000e+00 : f32
    %88 = vector.broadcast %cst_46 : f32 to vector<4x8x8xf32>
    %89 = arith.select %7, %87, %88 : vector<4x8x8xi1>, vector<4x8x8xf32>
    %cst_47 = arith.constant dense<0.000000e+00> : vector<4x8xf32>
    %90 = vector.multi_reduction <add>, %89, %cst_47 [2] : vector<4x8x8xf32> to vector<4x8xf32>
    %91 = vector.shape_cast %90 : vector<4x8xf32> to vector<4x8x1xf32>
    %cst_48 = arith.constant 9.99999971E-10 : f32
    %92 = vector.broadcast %cst_48 : f32 to vector<4x8x1xf32>
    %93 = arith.maximumf %91, %92 : vector<4x8x1xf32>
    %94 = tpu.reciprocal %93 {approx = true} : vector<4x8x1xf32> -> vector<4x8x1xf32>
    %95 = vector.broadcast %94 : vector<4x8x1xf32> to vector<4x8x8xf32>
    %96 = arith.mulf %89, %95 : vector<4x8x8xf32>
    %97 = arith.truncf %96 : vector<4x8x8xf32> to vector<4x8x8xbf16>
    "tpu.trace_start"() <{level = 10 : i32, message = "hij,hjc->hic"}> : () -> ()
    %cst_49 = arith.constant dense<0.000000e+00> : vector<4x8x32xf32>
    %98 = tpu.matmul %97, %68, %cst_49 {dimension_numbers = #tpu.dot_dimension_numbers<[2], [1], [1], [2], [0, 0, 0, 1, 1, 2], [0], [0]>} : vector<4x8x8xbf16>, vector<4x8x32xbf16>, vector<4x8x32xf32> -> vector<4x8x32xf32>
    "tpu.trace_stop"() : () -> ()
    %99 = vector.broadcast %0 : vector<4x1x32xf32> to vector<4x8x32xf32>
    %100 = arith.mulf %98, %99 : vector<4x8x32xf32>
    %cst_50 = arith.constant dense<0.000000e+00> : vector<8x32xf32>
    %101 = vector.multi_reduction <add>, %100, %cst_50 [0] : vector<4x8x32xf32> to vector<8x32xf32>
    %102 = vector.broadcast %62 : vector<1x32xf32> to vector<8x32xf32>
    %103 = arith.addf %101, %102 : vector<8x32xf32>
    %104 = arith.negf %103 : vector<8x32xf32>
    %105 = math.exp %104 : vector<8x32xf32>
    %cst_51 = arith.constant 1.000000e+00 : f32
    %106 = vector.broadcast %cst_51 : f32 to vector<8x32xf32>
    %107 = arith.addf %106, %105 : vector<8x32xf32>
    %108 = arith.divf %106, %107 : vector<8x32xf32>
    %109 = arith.truncf %108 : vector<8x32xf32> to vector<8x32xbf16>
    %c0_52 = arith.constant 0 : index
    %c0_53 = arith.constant 0 : index
    %110 = vector.load %arg11[%c0_52, %c0_53] : memref<32x93xbf16, #tpu.memory_space<vmem>>, vector<32x93xbf16>
    %cst_54 = arith.constant dense<0.000000e+00> : vector<8x93xf32>
    %111 = tpu.matmul %109, %110, %cst_54 {dimension_numbers = #tpu.dot_dimension_numbers<[1], [0], [0], [1], [0, 0, 1, 1], [], []>} : vector<8x32xbf16>, vector<32x93xbf16>, vector<8x93xf32> -> vector<8x93xf32>
    %c0_55 = arith.constant 0 : index
    %c0_56 = arith.constant 0 : index
    %112 = vector.load %arg12[%c0_55, %c0_56] : memref<1x93xf32, #tpu.memory_space<vmem>>, vector<1x93xf32>
    %113 = vector.broadcast %112 : vector<1x93xf32> to vector<8x93xf32>
    %114 = arith.addf %111, %113 : vector<8x93xf32>
    %cst_57 = arith.constant 0.000000e+00 : f32
    %115 = vector.broadcast %cst_57 : f32 to vector<8x93xf32>
    %116 = arith.maximumf %114, %115 : vector<8x93xf32>
    %117 = arith.truncf %116 : vector<8x93xf32> to vector<8x93xbf16>
    %c0_58 = arith.constant 0 : index
    %c0_59 = arith.constant 0 : index
    %118 = vector.load %arg13[%c0_58, %c0_59] : memref<93x93xbf16, #tpu.memory_space<vmem>>, vector<93x93xbf16>
    %cst_60 = arith.constant dense<0.000000e+00> : vector<8x93xf32>
    %119 = tpu.matmul %117, %118, %cst_60 {dimension_numbers = #tpu.dot_dimension_numbers<[1], [0], [0], [1], [0, 0, 1, 1], [], []>} : vector<8x93xbf16>, vector<93x93xbf16>, vector<8x93xf32> -> vector<8x93xf32>
    %c0_61 = arith.constant 0 : index
    %c0_62 = arith.constant 0 : index
    %120 = vector.load %arg14[%c0_61, %c0_62] : memref<1x93xf32, #tpu.memory_space<vmem>>, vector<1x93xf32>
    %121 = vector.broadcast %120 : vector<1x93xf32> to vector<8x93xf32>
    %122 = arith.addf %119, %121 : vector<8x93xf32>
    %c0_63 = arith.constant 0 : index
    %c0_64 = arith.constant 0 : index
    %123 = vector.load %arg15[%c0_63, %c0_64] : memref<8x93xf32, #tpu.memory_space<vmem>>, vector<8x93xf32>
    tpu.vector_store %arg15[%c0_63, %c0_64], %122 {strides = array<i32>} : memref<8x93xf32, #tpu.memory_space<vmem>>, vector<8x93xf32>,
    return
  }
}

</mosaic_0001>

<llo_original>
// kernel: generator_forward.1
$region0: #{generator_forward.1}
  #allocation0 [shape = 'u32[]', space=smem, size = 0x4, offset = 0x4, fixed_abs, tag = 'smem constant byte address 0x4 - core index']
  #allocation1 [shape = 'u32[72,128]{1,0:T(1,128)}', space=vmem, size = 0x9000, scoped, tag = 'internal scratch']
  %s0 = inlined_call_operand.vmem [shape: f32[8,16], index: 0, kind: input, shape index: {}]
  %s1 = inlined_call_operand.vmem [shape: bf16[8,8], index: 1, kind: input, shape index: {}]
  %s2 = inlined_call_operand.vmem [shape: f32[4,1,32], index: 2, kind: input, shape index: {}]
  %s3 = inlined_call_operand.vmem [shape: bf16[16,32], index: 3, kind: input, shape index: {}]
  %s4 = inlined_call_operand.vmem [shape: bf16[4,1,32], index: 4, kind: input, shape index: {}]
  %s5 = inlined_call_operand.vmem [shape: bf16[4,1,32], index: 5, kind: input, shape index: {}]
  %s6 = inlined_call_operand.vmem [shape: f32[1,32], index: 6, kind: input, shape index: {}]
  %s7 = inlined_call_operand.vmem [shape: bf16[32,32], index: 7, kind: input, shape index: {}]
  %s8 = inlined_call_operand.vmem [shape: bf16[4,1,32], index: 8, kind: input, shape index: {}]
  %s9 = inlined_call_operand.vmem [shape: bf16[4,1,32], index: 9, kind: input, shape index: {}]
  %s10 = inlined_call_operand.vmem [shape: f32[1,32], index: 10, kind: input, shape index: {}]
  %s11 = inlined_call_operand.vmem [shape: bf16[32,93], index: 11, kind: input, shape index: {}]
  %s12 = inlined_call_operand.vmem [shape: f32[1,93], index: 12, kind: input, shape index: {}]
  %s13 = inlined_call_operand.vmem [shape: bf16[93,93], index: 13, kind: input, shape index: {}]
  %s14 = inlined_call_operand.vmem [shape: f32[1,93], index: 14, kind: input, shape index: {}]
  %s15 = inlined_call_operand.hbm [shape: f32[8,93], index: 15, kind: output, shape index: {}]
  %s16 = sld [smem:[#allocation0]]
  $region70: #{generator_forward.1} parent=0
    _
  %s18 = ssub.s32 1, %s16
  %s19 = scalar_select 0, %s18, %s16
  $region1: #{generator_forward.1} parent=0
    #allocation2 [shape = 'u8[4096]{0}', space=vmem, size = 0x1000, scoped, tag = 'output window, operand 0, single buffered']
    #allocation3 [shape = 's32[1]{0}', space=sflag, size = 0x4, scoped, tag = 'scoped memory for generator_forward.1']
    %20 = vsyncpa [#allocation3], 0
    // Predicated region
    $region2: #{generator_forward.1} parent=1 // pred_check
      _
    $region3: #{generator_forward.1} parent=1 // pred_check_branch
      %22 = sbr.rel (0) target = $region5
    $region4: #{generator_forward.1} parent=1 // pred_region
      _
    $region5: #{generator_forward.1} parent=1 // pred_fallthru
      _
    // Predicated region
    $region6: #{generator_forward.1} parent=1 // pred_check
      _
    $region7: #{generator_forward.1} parent=1 // pred_check_branch
      %24 = sbr.rel (0) target = $region9
    $region8: #{generator_forward.1} parent=1 // pred_region
      _
    $region9: #{generator_forward.1} parent=1 // pred_fallthru
      _
    // Predicated region
    $region10: #{generator_forward.1} parent=1 // pred_check
      _
    $region11: #{generator_forward.1} parent=1 // pred_check_branch
      %26 = sbr.rel (0) target = $region13
    $region12: #{generator_forward.1} parent=1 // pred_region
      _
    $region13: #{generator_forward.1} parent=1 // pred_fallthru
      _
    // Predicated region
    $region14: #{generator_forward.1} parent=1 // pred_check
      _
    $region15: #{generator_forward.1} parent=1 // pred_check_branch
      %28 = sbr.rel (0) target = $region17
    $region16: #{generator_forward.1} parent=1 // pred_region
      _
    $region17: #{generator_forward.1} parent=1 // pred_fallthru
      _
    // Predicated region
    $region18: #{generator_forward.1} parent=1 // pred_check
      _
    $region19: #{generator_forward.1} parent=1 // pred_check_branch
      %30 = sbr.rel (0) target = $region21
    $region20: #{generator_forward.1} parent=1 // pred_region
      _
    $region21: #{generator_forward.1} parent=1 // pred_fallthru
      _
    // Predicated region
    $region22: #{generator_forward.1} parent=1 // pred_check
      _
    $region23: #{generator_forward.1} parent=1 // pred_check_branch
      %32 = sbr.rel (0) target = $region25
    $region24: #{generator_forward.1} parent=1 // pred_region
      _
    $region25: #{generator_forward.1} parent=1 // pred_fallthru
      _
    // Predicated region
    $region26: #{generator_forward.1} parent=1 // pred_check
      _
    $region27: #{generator_forward.1} parent=1 // pred_check_branch
      %34 = sbr.rel (0) target = $region29
    $region28: #{generator_forward.1} parent=1 // pred_region
      _
    $region29: #{generator_forward.1} parent=1 // pred_fallthru
      _
    // Predicated region
    $region30: #{generator_forward.1} parent=1 // pred_check
      _
    $region31: #{generator_forward.1} parent=1 // pred_check_branch
      %36 = sbr.rel (0) target = $region33
    $region32: #{generator_forward.1} parent=1 // pred_region
      _
    $region33: #{generator_forward.1} parent=1 // pred_fallthru
      _
    // Predicated region
    $region34: #{generator_forward.1} parent=1 // pred_check
      _
    $region35: #{generator_forward.1} parent=1 // pred_check_branch
      %38 = sbr.rel (0) target = $region37
    $region36: #{generator_forward.1} parent=1 // pred_region
      _
    $region37: #{generator_forward.1} parent=1 // pred_fallthru
      _
    // Predicated region
    $region38: #{generator_forward.1} parent=1 // pred_check
      _
    $region39: #{generator_forward.1} parent=1 // pred_check_branch
      %40 = sbr.rel (0) target = $region41
    $region40: #{generator_forward.1} parent=1 // pred_region
      _
    $region41: #{generator_forward.1} parent=1 // pred_fallthru
      _
    // Predicated region
    $region42: #{generator_forward.1} parent=1 // pred_check
      _
    $region43: #{generator_forward.1} parent=1 // pred_check_branch
      %42 = sbr.rel (0) target = $region45
    $region44: #{generator_forward.1} parent=1 // pred_region
      _
    $region45: #{generator_forward.1} parent=1 // pred_fallthru
      _
    // Predicated region
    $region46: #{generator_forward.1} parent=1 // pred_check
      _
    $region47: #{generator_forward.1} parent=1 // pred_check_branch
      %44 = sbr.rel (0) target = $region49
    $region48: #{generator_forward.1} parent=1 // pred_region
      _
    $region49: #{generator_forward.1} parent=1 // pred_fallthru
      _
    // Predicated region
    $region50: #{generator_forward.1} parent=1 // pred_check
      _
    $region51: #{generator_forward.1} parent=1 // pred_check_branch
      %46 = sbr.rel (0) target = $region53
    $region52: #{generator_forward.1} parent=1 // pred_region
      _
    $region53: #{generator_forward.1} parent=1 // pred_fallthru
      _
    // Predicated region
    $region54: #{generator_forward.1} parent=1 // pred_check
      _
    $region55: #{generator_forward.1} parent=1 // pred_check_branch
      %48 = sbr.rel (0) target = $region57
    $region56: #{generator_forward.1} parent=1 // pred_region
      _
    $region57: #{generator_forward.1} parent=1 // pred_fallthru
      _
    // Predicated region
    $region58: #{generator_forward.1} parent=1 // pred_check
      _
    $region59: #{generator_forward.1} parent=1 // pred_check_branch
      %50 = sbr.rel (0) target = $region61
    $region60: #{generator_forward.1} parent=1 // pred_region
      _
    $region61: #{generator_forward.1} parent=1 // pred_fallthru
      _
    %v52 = vld [vmem:[%s2] sm:$0x1]
    %v53 = vld [vmem:[%s2 + $0x1] sm:$0x1]
    %v54 = vld [vmem:[%s2 + $0x2] sm:$0x1]
    %v55 = vld [vmem:[%s2 + $0x3] sm:$0x1]
    %v56 = vld [vmem:[%s1] sm:$0xf]
    %v57 = vunpack.c.l.bf16 %v56
    %vm58 = vcmp.gt.f32.partialorder %v57, 0.0
    %v59 = vld [vmem:[%s0] sm:$0xff]
    %v60 = vld [vmem:[%s3] sm:$0xf]
    %v61 = vld [vmem:[%s3 + $0x4] sm:$0xf]
    %v62 = vld [vmem:[%s4] sm:$0x1]
    %v63 = vld [vmem:[%s4 + $0x1] sm:$0x1]
    %v64 = vld [vmem:[%s4 + $0x2] sm:$0x1]
    %v65 = vld [vmem:[%s4 + $0x3] sm:$0x1]
    %v66 = vld [vmem:[%s5] sm:$0x1]
    %v67 = vld [vmem:[%s5 + $0x1] sm:$0x1]
    %v68 = vld [vmem:[%s5 + $0x2] sm:$0x1]
    %v69 = vld [vmem:[%s5 + $0x3] sm:$0x1]
    %v70 = vld [vmem:[%s6] sm:$0x1]
    %v71 = vpack.c.bf16 %v59, %v59
    %v74 = vunpack.c.l.b16 %v60
    %v75 = vunpack.c.l.b16 %v61
    %v76 = vpack.c.b16 %v75, %v74
    %vm78 = vcmask 130048
    %v80 = vsel %vm78, %v71, 0
    %82 = vmatpush.bf16.msra.mxu0 0
    %83 = vmatpush.bf16.msra.mxu0 0
    %84 = vmatpush.bf16.msra.mxu0 0
    %85 = vmatpush.bf16.msra.mxu0 0
    %86 = vmatpush.bf16.msra.mxu0 0
    %87 = vmatpush.bf16.msra.mxu0 0
    %88 = vmatpush.bf16.msra.mxu0 0
    %89 = vmatpush.bf16.msra.mxu0 %v76
    %90 = vmatmul.bf16.gmra.mxu0 %v80
    %v91 = vpop.f32.mrf.mxu0
    %v92 = vadd.f32 0.0, %v91
    %v93 = vpop.f32.mrf.mxu0
    %94 = vdwg.mxu0
    %v95 = vpack.c.bf16 %v92, %v92
    %vm96 = vcmask 261120
    %v98 = vsel %vm96, %v95, 0
    %v101 = vsel %vm96, %v66, 0
    %103 = vmatpush.bf16.xpose.msra.mxu0 0
    %104 = vmatpush.bf16.xpose.msra.mxu0 0
    %105 = vmatpush.bf16.xpose.msra.mxu0 0
    %106 = vmatpush.bf16.xpose.msra.mxu0 0
    %107 = vmatpush.bf16.xpose.msra.mxu0 0
    %108 = vmatpush.bf16.xpose.msra.mxu0 0
    %109 = vmatpush.bf16.xpose.msra.mxu0 0
    %110 = vmatpush.bf16.xpose.msra.mxu0 %v101
    %111 = vmatmul.bf16.gmra.mxu0 %v98
    %v112 = vpop.f32.mrf.mxu0
    %v113 = vadd.f32 0.0, %v112
    %v114 = vpop.f32.mrf.mxu0
    %115 = vdwg.mxu0
    %v117 = vsel %vm96, %v67, 0
    %119 = vmatpush.bf16.xpose.msra.mxu0 0
    %120 = vmatpush.bf16.xpose.msra.mxu0 0
    %121 = vmatpush.bf16.xpose.msra.mxu0 0
    %122 = vmatpush.bf16.xpose.msra.mxu0 0
    %123 = vmatpush.bf16.xpose.msra.mxu0 0
    %124 = vmatpush.bf16.xpose.msra.mxu0 0
    %125 = vmatpush.bf16.xpose.msra.mxu0 0
    %126 = vmatpush.bf16.xpose.msra.mxu0 %v117
    %127 = vmatmul.bf16.gmra.mxu0 %v98
    %v128 = vpop.f32.mrf.mxu0
    %v129 = vadd.f32 0.0, %v128
    %v130 = vpop.f32.mrf.mxu0
    %131 = vdwg.mxu0
    %v133 = vsel %vm96, %v68, 0
    %135 = vmatpush.bf16.xpose.msra.mxu0 0
    %136 = vmatpush.bf16.xpose.msra.mxu0 0
    %137 = vmatpush.bf16.xpose.msra.mxu0 0
    %138 = vmatpush.bf16.xpose.msra.mxu0 0
    %139 = vmatpush.bf16.xpose.msra.mxu0 0
    %140 = vmatpush.bf16.xpose.msra.mxu0 0
    %141 = vmatpush.bf16.xpose.msra.mxu0 0
    %142 = vmatpush.bf16.xpose.msra.mxu0 %v133
    %143 = vmatmul.bf16.gmra.mxu0 %v98
    %v144 = vpop.f32.mrf.mxu0
    %v145 = vadd.f32 0.0, %v144
    %v146 = vpop.f32.mrf.mxu0
    %147 = vdwg.mxu0
    %v149 = vsel %vm96, %v69, 0
    %151 = vmatpush.bf16.xpose.msra.mxu0 0
    %152 = vmatpush.bf16.xpose.msra.mxu0 0
    %153 = vmatpush.bf16.xpose.msra.mxu0 0
    %154 = vmatpush.bf16.xpose.msra.mxu0 0
    %155 = vmatpush.bf16.xpose.msra.mxu0 0
    %156 = vmatpush.bf16.xpose.msra.mxu0 0
    %157 = vmatpush.bf16.xpose.msra.mxu0 0
    %158 = vmatpush.bf16.xpose.msra.mxu0 %v149
    %159 = vmatmul.bf16.gmra.mxu0 %v98
    %v160 = vpop.f32.mrf.mxu0
    %v161 = vadd.f32 0.0, %v160
    %v162 = vpop.f32.mrf.mxu0
    %163 = vdwg.mxu0
    %v165 = vsel %vm96, %v62, 0
    %167 = vmatpush.bf16.xpose.msra.mxu0 0
    %168 = vmatpush.bf16.xpose.msra.mxu0 0
    %169 = vmatpush.bf16.xpose.msra.mxu0 0
    %170 = vmatpush.bf16.xpose.msra.mxu0 0
    %171 = vmatpush.bf16.xpose.msra.mxu0 0
    %172 = vmatpush.bf16.xpose.msra.mxu0 0
    %173 = vmatpush.bf16.xpose.msra.mxu0 0
    %174 = vmatpush.bf16.xpose.msra.mxu0 %v98
    %175 = vmatmul.bf16.gmra.mxu0 %v165
    %v176 = vpop.f32.mrf.mxu0
    %v177 = vadd.f32 0.0, %v176
    %v178 = vpop.f32.mrf.mxu0
    %179 = vdwg.mxu0
    %v181 = vsel %vm96, %v63, 0
    %183 = vmatpush.bf16.xpose.msra.mxu0 0
    %184 = vmatpush.bf16.xpose.msra.mxu0 0
    %185 = vmatpush.bf16.xpose.msra.mxu0 0
    %186 = vmatpush.bf16.xpose.msra.mxu0 0
    %187 = vmatpush.bf16.xpose.msra.mxu0 0
    %188 = vmatpush.bf16.xpose.msra.mxu0 0
    %189 = vmatpush.bf16.xpose.msra.mxu0 0
    %190 = vmatpush.bf16.xpose.msra.mxu0 %v98
    %191 = vmatmul.bf16.gmra.mxu0 %v181
    %v192 = vpop.f32.mrf.mxu0
    %v193 = vadd.f32 0.0, %v192
    %v194 = vpop.f32.mrf.mxu0
    %195 = vdwg.mxu0
    %v197 = vsel %vm96, %v64, 0
    %199 = vmatpush.bf16.xpose.msra.mxu0 0
    %200 = vmatpush.bf16.xpose.msra.mxu0 0
    %201 = vmatpush.bf16.xpose.msra.mxu0 0
    %202 = vmatpush.bf16.xpose.msra.mxu0 0
    %203 = vmatpush.bf16.xpose.msra.mxu0 0
    %204 = vmatpush.bf16.xpose.msra.mxu0 0
    %205 = vmatpush.bf16.xpose.msra.mxu0 0
    %206 = vmatpush.bf16.xpose.msra.mxu0 %v98
    %207 = vmatmul.bf16.gmra.mxu0 %v197
    %v208 = vpop.f32.mrf.mxu0
    %v209 = vadd.f32 0.0, %v208
    %v210 = vpop.f32.mrf.mxu0
    %211 = vdwg.mxu0
    %v213 = vsel %vm96, %v65, 0
    %215 = vmatpush.bf16.xpose.msra.mxu0 0
    %216 = vmatpush.bf16.xpose.msra.mxu0 0
    %217 = vmatpush.bf16.xpose.msra.mxu0 0
    %218 = vmatpush.bf16.xpose.msra.mxu0 0
    %219 = vmatpush.bf16.xpose.msra.mxu0 0
    %220 = vmatpush.bf16.xpose.msra.mxu0 0
    %221 = vmatpush.bf16.xpose.msra.mxu0 0
    %222 = vmatpush.bf16.xpose.msra.mxu0 %v98
    %223 = vmatmul.bf16.gmra.mxu0 %v213
    %v224 = vpop.f32.mrf.mxu0
    %v225 = vadd.f32 0.0, %v224
    %v226 = vpop.f32.mrf.mxu0
    %227 = vdwg.mxu0
    %229 = vset.pattern.permute.xlu0 0
    %230 = vperm.xlu0 %229, %v113
    %v231 = vpop.permute.xlu0 %230
    %234 = vset.pattern.permute.xlu0 0
    %235 = vperm.xlu0 %234, %v129
    %v236 = vpop.permute.xlu0 %235
    %239 = vset.pattern.permute.xlu0 0
    %240 = vperm.xlu0 %239, %v145
    %v241 = vpop.permute.xlu0 %240
    %244 = vset.pattern.permute.xlu0 0
    %245 = vperm.xlu0 %244, %v161
    %v246 = vpop.permute.xlu0 %245
    %v248 = vperm.slane %v177, 0
    %v249 = vperm.slane %v193, 0
    %v250 = vperm.slane %v209, 0
    %v251 = vperm.slane %v225, 0
    %v252 = vadd.f32 %v231, %v248
    %v253 = vadd.f32 %v236, %v249
    %v254 = vadd.f32 %v241, %v250
    %v255 = vadd.f32 %v246, %v251
    %vm256 = vcmp.ge.f32.partialorder %v252, 0.0
    %vm257 = vcmp.ge.f32.partialorder %v253, 0.0
    %vm258 = vcmp.ge.f32.partialorder %v254, 0.0
    %vm259 = vcmp.ge.f32.partialorder %v255, 0.0
    %v260 = vmul.f32 %v252, 0.2
    %v261 = vmul.f32 %v253, 0.2
    %v262 = vmul.f32 %v254, 0.2
    %v263 = vmul.f32 %v255, 0.2
    %v264 = vsel %vm256, %v252, %v260
    %v265 = vsel %vm257, %v253, %v261
    %v266 = vsel %vm258, %v254, %v262
    %v267 = vsel %vm259, %v255, %v263
    %v268 = vsel %vm58, %v264, -1e+09
    %v269 = vsel %vm58, %v265, -1e+09
    %v270 = vsel %vm58, %v266, -1e+09
    %v271 = vsel %vm58, %v267, -1e+09
    %vm272 = vcmask 64512
    %v273 = vsel %vm272, %v268, -inf
    %274 = vmax.xlane.f32.xlu0 %v273
    %v275 = vpop.xlane.xlu0 %274
    %v276 = vsel %vm272, %v269, -inf
    %277 = vmax.xlane.f32.xlu0 %v276
    %v278 = vpop.xlane.xlu0 %277
    %v279 = vsel %vm272, %v270, -inf
    %280 = vmax.xlane.f32.xlu0 %v279
    %v281 = vpop.xlane.xlu0 %280
    %v282 = vsel %vm272, %v271, -inf
    %283 = vmax.xlane.f32.xlu0 %v282
    %v284 = vpop.xlane.xlu0 %283
    %v285 = vsub.f32 %v268, %v275
    %v286 = vsub.f32 %v269, %v278
    %v287 = vsub.f32 %v270, %v281
    %v288 = vsub.f32 %v271, %v284
    %v289 = vmul.f32 %v285, 1.442695
    %v290 = vpow.pop %v289
    %v291 = vmul.f32 %v286, 1.442695
    %v292 = vpow.pop %v291
    %v293 = vmul.f32 %v287, 1.442695
    %v294 = vpow.pop %v293
    %v295 = vmul.f32 %v288, 1.442695
    %v296 = vpow.pop %v295
    %v297 = vsel %vm58, %v290, 0.0
    %v298 = vsel %vm58, %v292, 0.0
    %v299 = vsel %vm58, %v294, 0.0
    %v300 = vsel %vm58, %v296, 0.0
    %v301 = vsel %vm272, %v297, 0.0
    %302 = vadd.xlane.f32.xlu0 %v301
    %v303 = vpop.xlane.xlu0 %302
    %v304 = vsel %vm272, %v298, 0.0
    %305 = vadd.xlane.f32.xlu0 %v304
    %v306 = vpop.xlane.xlu0 %305
    %v307 = vsel %vm272, %v299, 0.0
    %308 = vadd.xlane.f32.xlu0 %v307
    %v309 = vpop.xlane.xlu0 %308
    %v310 = vsel %vm272, %v300, 0.0
    %311 = vadd.xlane.f32.xlu0 %v310
    %v312 = vpop.xlane.xlu0 %311
    %v313 = vmax.f32 %v303, 1e-09
    %v314 = vmax.f32 %v306, 1e-09
    %v315 = vmax.f32 %v309, 1e-09
    %v316 = vmax.f32 %v312, 1e-09
    %v317 = vrcp.pop %v313
    %v318 = vrcp.pop %v314
    %v319 = vrcp.pop %v315
    %v320 = vrcp.pop %v316
    %v321 = vmul.f32 %v297, %v317
    %v322 = vmul.f32 %v298, %v318
    %v323 = vmul.f32 %v299, %v319
    %v324 = vmul.f32 %v300, %v320
    %v325 = vpack.c.bf16 %v321, %v321
    %v326 = vpack.c.bf16 %v322, %v322
    %v327 = vpack.c.bf16 %v323, %v323
    %v328 = vpack.c.bf16 %v324, %v324
    %v330 = vsel %vm272, %v325, 0
    %vm332 = vcmask 1043456
    %v333 = vsel %vm332, %v95, 0
    %335 = vmatpush.bf16.msra.mxu0 0
    %336 = vmatpush.bf16.msra.mxu0 0
    %337 = vmatpush.bf16.msra.mxu0 0
    %338 = vmatpush.bf16.msra.mxu0 0
    %339 = vmatpush.bf16.msra.mxu0 0
    %340 = vmatpush.bf16.msra.mxu0 0
    %341 = vmatpush.bf16.msra.mxu0 0
    %342 = vmatpush.bf16.msra.mxu0 %v333
    %343 = vmatmul.bf16.gmra.mxu0 %v330
    %v344 = vpop.f32.mrf.mxu0
    %v345 = vadd.f32 0.0, %v344
    %v346 = vpop.f32.mrf.mxu0
    %347 = vdwg.mxu0
    %v349 = vsel %vm272, %v326, 0
    %351 = vmatpush.bf16.msra.mxu0 0
    %352 = vmatpush.bf16.msra.mxu0 0
    %353 = vmatpush.bf16.msra.mxu0 0
    %354 = vmatpush.bf16.msra.mxu0 0
    %355 = vmatpush.bf16.msra.mxu0 0
    %356 = vmatpush.bf16.msra.mxu0 0
    %357 = vmatpush.bf16.msra.mxu0 0
    %358 = vmatpush.bf16.msra.mxu0 %v333
    %359 = vmatmul.bf16.gmra.mxu0 %v349
    %v360 = vpop.f32.mrf.mxu0
    %v361 = vadd.f32 0.0, %v360
    %v362 = vpop.f32.mrf.mxu0
    %363 = vdwg.mxu0
    %v365 = vsel %vm272, %v327, 0
    %367 = vmatpush.bf16.msra.mxu0 0
    %368 = vmatpush.bf16.msra.mxu0 0
    %369 = vmatpush.bf16.msra.mxu0 0
    %370 = vmatpush.bf16.msra.mxu0 0
    %371 = vmatpush.bf16.msra.mxu0 0
    %372 = vmatpush.bf16.msra.mxu0 0
    %373 = vmatpush.bf16.msra.mxu0 0
    %374 = vmatpush.bf16.msra.mxu0 %v333
    %375 = vmatmul.bf16.gmra.mxu0 %v365
    %v376 = vpop.f32.mrf.mxu0
    %v377 = vadd.f32 0.0, %v376
    %v378 = vpop.f32.mrf.mxu0
    %379 = vdwg.mxu0
    %v381 = vsel %vm272, %v328, 0
    %383 = vmatpush.bf16.msra.mxu0 0
    %384 = vmatpush.bf16.msra.mxu0 0
    %385 = vmatpush.bf16.msra.mxu0 0
    %386 = vmatpush.bf16.msra.mxu0 0
    %387 = vmatpush.bf16.msra.mxu0 0
    %388 = vmatpush.bf16.msra.mxu0 0
    %389 = vmatpush.bf16.msra.mxu0 0
    %390 = vmatpush.bf16.msra.mxu0 %v333
    %391 = vmatmul.bf16.gmra.mxu0 %v381
    %v392 = vpop.f32.mrf.mxu0
    %v393 = vadd.f32 0.0, %v392
    %v394 = vpop.f32.mrf.mxu0
    %395 = vdwg.mxu0
    %v400 = vperm.slane %v52, 0
    %v401 = vperm.slane %v53, 0
    %v402 = vperm.slane %v54, 0
    %v403 = vperm.slane %v55, 0
    %v408 = vmul.f32 %v345, %v400
    %v409 = vmul.f32 %v361, %v401
    %v410 = vmul.f32 %v377, %v402
    %v411 = vmul.f32 %v393, %v403
    %v412 = vsel %vm96, %v408, 0.0
    %v413 = vsel %vm96, %v409, 0.0
    %v414 = vadd.f32 %v412, %v413
    %v415 = vsel %vm96, %v410, 0.0
    %v416 = vadd.f32 %v414, %v415
    %v417 = vsel %vm96, %v411, 0.0
    %v418 = vadd.f32 %v416, %v417
    %v420 = vperm.slane %v70, 0
    %v422 = vadd.f32 %v418, %v420
    %v423 = vxor.u32 %v422, 2147483648
    %v424 = vmul.f32 %v423, 1.442695
    %v425 = vpow.pop %v424
    %v426 = vadd.f32 %v425, 1.0
    %v427 = vrcp.pop %v426
    %v428 = vmul.f32 %v426, %v427
    %v429 = vsub.f32 1.0, %v428
    %v430 = vmul.f32 %v427, %v429
    %v431 = vadd.f32 %v427, %v430
    %vm432 = vweird.f32 %v426
    %vm433 = vweird.f32 %v427
    %vm434 = vmor %vm432, %vm433
    %v435 = vsel %vm434, %v427, %v431
    %v436 = vand.u32 2147483647, %v426
    %vm437 = vcmp.eq.f32.partialorder %v436, 8.507059e+37
    %v438 = vand.u32 %v426, 2147483648
    %v439 = vor.u32 1.1754944e-38, %v438
    %v440 = vsel %vm437, %v439, %v435
    %v441 = vmul.f32 1.0, %v440
    %v442 = vld [vmem:[%s7] sm:$0xf]
    %v443 = vld [vmem:[%s7 + $0x4] sm:$0xf]
    %v444 = vld [vmem:[%s7 + $0x8] sm:$0xf]
    %v445 = vld [vmem:[%s7 + $0xc] sm:$0xf]
    %v446 = vld [vmem:[%s8] sm:$0x1]
    %v447 = vld [vmem:[%s8 + $0x1] sm:$0x1]
    %v448 = vld [vmem:[%s8 + $0x2] sm:$0x1]
    %v449 = vld [vmem:[%s8 + $0x3] sm:$0x1]
    %v450 = vld [vmem:[%s9] sm:$0x1]
    %v451 = vld [vmem:[%s9 + $0x1] sm:$0x1]
    %v452 = vld [vmem:[%s9 + $0x2] sm:$0x1]
    %v453 = vld [vmem:[%s9 + $0x3] sm:$0x1]
    %v454 = vld [vmem:[%s10] sm:$0x1]
    %v455 = vpack.c.bf16 %v441, %v441
    %v460 = vunpack.c.l.b16 %v442
    %v461 = vunpack.c.l.b16 %v443
    %v462 = vunpack.c.l.b16 %v444
    %v463 = vunpack.c.l.b16 %v445
    %v464 = vpack.c.b16 %v461, %v460
    %v465 = vpack.c.b16 %v463, %v462
    %v469 = vsel %vm96, %v455, 0
    %471 = vmatpush.bf16.msra.mxu0 0
    %472 = vmatpush.bf16.msra.mxu0 0
    %473 = vmatpush.bf16.msra.mxu0 0
    %474 = vmatpush.bf16.msra.mxu0 0
    %475 = vmatpush.bf16.msra.mxu0 0
    %476 = vmatpush.bf16.msra.mxu0 0
    %477 = vmatpush.bf16.msra.mxu0 %v465
    %478 = vmatpush.bf16.msra.mxu0 %v464
    %479 = vmatmul.bf16.gmra.mxu0 %v469
    %v480 = vpop.f32.mrf.mxu0
    %v481 = vadd.f32 0.0, %v480
    %v482 = vpop.f32.mrf.mxu0
    %483 = vdwg.mxu0
    %v484 = vpack.c.bf16 %v481, %v481
    %v486 = vsel %vm96, %v484, 0
    %v489 = vsel %vm96, %v450, 0
    %491 = vmatpush.bf16.xpose.msra.mxu0 0
    %492 = vmatpush.bf16.xpose.msra.mxu0 0
    %493 = vmatpush.bf16.xpose.msra.mxu0 0
    %494 = vmatpush.bf16.xpose.msra.mxu0 0
    %495 = vmatpush.bf16.xpose.msra.mxu0 0
    %496 = vmatpush.bf16.xpose.msra.mxu0 0
    %497 = vmatpush.bf16.xpose.msra.mxu0 0
    %498 = vmatpush.bf16.xpose.msra.mxu0 %v489
    %499 = vmatmul.bf16.gmra.mxu0 %v486
    %v500 = vpop.f32.mrf.mxu0
    %v501 = vadd.f32 0.0, %v500
    %v502 = vpop.f32.mrf.mxu0
    %503 = vdwg.mxu0
    %v505 = vsel %vm96, %v451, 0
    %507 = vmatpush.bf16.xpose.msra.mxu0 0
    %508 = vmatpush.bf16.xpose.msra.mxu0 0
    %509 = vmatpush.bf16.xpose.msra.mxu0 0
    %510 = vmatpush.bf16.xpose.msra.mxu0 0
    %511 = vmatpush.bf16.xpose.msra.mxu0 0
    %512 = vmatpush.bf16.xpose.msra.mxu0 0
    %513 = vmatpush.bf16.xpose.msra.mxu0 0
    %514 = vmatpush.bf16.xpose.msra.mxu0 %v505
    %515 = vmatmul.bf16.gmra.mxu0 %v486
    %v516 = vpop.f32.mrf.mxu0
    %v517 = vadd.f32 0.0, %v516
    %v518 = vpop.f32.mrf.mxu0
    %519 = vdwg.mxu0
    %v521 = vsel %vm96, %v452, 0
    %523 = vmatpush.bf16.xpose.msra.mxu0 0
    %524 = vmatpush.bf16.xpose.msra.mxu0 0
    %525 = vmatpush.bf16.xpose.msra.mxu0 0
    %526 = vmatpush.bf16.xpose.msra.mxu0 0
    %527 = vmatpush.bf16.xpose.msra.mxu0 0
    %528 = vmatpush.bf16.xpose.msra.mxu0 0
    %529 = vmatpush.bf16.xpose.msra.mxu0 0
    %530 = vmatpush.bf16.xpose.msra.mxu0 %v521
    %531 = vmatmul.bf16.gmra.mxu0 %v486
    %v532 = vpop.f32.mrf.mxu0
    %v533 = vadd.f32 0.0, %v532
    %v534 = vpop.f32.mrf.mxu0
    %535 = vdwg.mxu0
    %v537 = vsel %vm96, %v453, 0
    %539 = vmatpush.bf16.xpose.msra.mxu0 0
    %540 = vmatpush.bf16.xpose.msra.mxu0 0
    %541 = vmatpush.bf16.xpose.msra.mxu0 0
    %542 = vmatpush.bf16.xpose.msra.mxu0 0
    %543 = vmatpush.bf16.xpose.msra.mxu0 0
    %544 = vmatpush.bf16.xpose.msra.mxu0 0
    %545 = vmatpush.bf16.xpose.msra.mxu0 0
    %546 = vmatpush.bf16.xpose.msra.mxu0 %v537
    %547 = vmatmul.bf16.gmra.mxu0 %v486
    %v548 = vpop.f32.mrf.mxu0
    %v549 = vadd.f32 0.0, %v548
    %v550 = vpop.f32.mrf.mxu0
    %551 = vdwg.mxu0
    %v553 = vsel %vm96, %v446, 0
    %555 = vmatpush.bf16.xpose.msra.mxu0 0
    %556 = vmatpush.bf16.xpose.msra.mxu0 0
    %557 = vmatpush.bf16.xpose.msra.mxu0 0
    %558 = vmatpush.bf16.xpose.msra.mxu0 0
    %559 = vmatpush.bf16.xpose.msra.mxu0 0
    %560 = vmatpush.bf16.xpose.msra.mxu0 0
    %561 = vmatpush.bf16.xpose.msra.mxu0 0
    %562 = vmatpush.bf16.xpose.msra.mxu0 %v486
    %563 = vmatmul.bf16.gmra.mxu0 %v553
    %v564 = vpop.f32.mrf.mxu0
    %v565 = vadd.f32 0.0, %v564
    %v566 = vpop.f32.mrf.mxu0
    %567 = vdwg.mxu0
    %v569 = vsel %vm96, %v447, 0
    %571 = vmatpush.bf16.xpose.msra.mxu0 0
    %572 = vmatpush.bf16.xpose.msra.mxu0 0
    %573 = vmatpush.bf16.xpose.msra.mxu0 0
    %574 = vmatpush.bf16.xpose.msra.mxu0 0
    %575 = vmatpush.bf16.xpose.msra.mxu0 0
    %576 = vmatpush.bf16.xpose.msra.mxu0 0
    %577 = vmatpush.bf16.xpose.msra.mxu0 0
    %578 = vmatpush.bf16.xpose.msra.mxu0 %v486
    %579 = vmatmul.bf16.gmra.mxu0 %v569
    %v580 = vpop.f32.mrf.mxu0
    %v581 = vadd.f32 0.0, %v580
    %v582 = vpop.f32.mrf.mxu0
    %583 = vdwg.mxu0
    %v585 = vsel %vm96, %v448, 0
    %587 = vmatpush.bf16.xpose.msra.mxu0 0
    %588 = vmatpush.bf16.xpose.msra.mxu0 0
    %589 = vmatpush.bf16.xpose.msra.mxu0 0
    %590 = vmatpush.bf16.xpose.msra.mxu0 0
    %591 = vmatpush.bf16.xpose.msra.mxu0 0
    %592 = vmatpush.bf16.xpose.msra.mxu0 0
    %593 = vmatpush.bf16.xpose.msra.mxu0 0
    %594 = vmatpush.bf16.xpose.msra.mxu0 %v486
    %595 = vmatmul.bf16.gmra.mxu0 %v585
    %v596 = vpop.f32.mrf.mxu0
    %v597 = vadd.f32 0.0, %v596
    %v598 = vpop.f32.mrf.mxu0
    %599 = vdwg.mxu0
    %v601 = vsel %vm96, %v449, 0
    %603 = vmatpush.bf16.xpose.msra.mxu0 0
    %604 = vmatpush.bf16.xpose.msra.mxu0 0
    %605 = vmatpush.bf16.xpose.msra.mxu0 0
    %606 = vmatpush.bf16.xpose.msra.mxu0 0
    %607 = vmatpush.bf16.xpose.msra.mxu0 0
    %608 = vmatpush.bf16.xpose.msra.mxu0 0
    %609 = vmatpush.bf16.xpose.msra.mxu0 0
    %610 = vmatpush.bf16.xpose.msra.mxu0 %v486
    %611 = vmatmul.bf16.gmra.mxu0 %v601
    %v612 = vpop.f32.mrf.mxu0
    %v613 = vadd.f32 0.0, %v612
    %v614 = vpop.f32.mrf.mxu0
    %615 = vdwg.mxu0
    %617 = vset.pattern.permute.xlu0 0
    %618 = vperm.xlu0 %617, %v501
    %v619 = vpop.permute.xlu0 %618
    %622 = vset.pattern.permute.xlu0 0
    %623 = vperm.xlu0 %622, %v517
    %v624 = vpop.permute.xlu0 %623
    %627 = vset.pattern.permute.xlu0 0
    %628 = vperm.xlu0 %627, %v533
    %v629 = vpop.permute.xlu0 %628
    %632 = vset.pattern.permute.xlu0 0
    %633 = vperm.xlu0 %632, %v549
    %v634 = vpop.permute.xlu0 %633
    %v636 = vperm.slane %v565, 0
    %v637 = vperm.slane %v581, 0
    %v638 = vperm.slane %v597, 0
    %v639 = vperm.slane %v613, 0
    %v640 = vadd.f32 %v619, %v636
    %v641 = vadd.f32 %v624, %v637
    %v642 = vadd.f32 %v629, %v638
    %v643 = vadd.f32 %v634, %v639
    %vm644 = vcmp.ge.f32.partialorder %v640, 0.0
    %vm645 = vcmp.ge.f32.partialorder %v641, 0.0
    %vm646 = vcmp.ge.f32.partialorder %v642, 0.0
    %vm647 = vcmp.ge.f32.partialorder %v643, 0.0
    %v648 = vmul.f32 %v640, 0.2
    %v649 = vmul.f32 %v641, 0.2
    %v650 = vmul.f32 %v642, 0.2
    %v651 = vmul.f32 %v643, 0.2
    %v652 = vsel %vm644, %v640, %v648
    %v653 = vsel %vm645, %v641, %v649
    %v654 = vsel %vm646, %v642, %v650
    %v655 = vsel %vm647, %v643, %v651
    %v656 = vsel %vm58, %v652, -1e+09
    %v657 = vsel %vm58, %v653, -1e+09
    %v658 = vsel %vm58, %v654, -1e+09
    %v659 = vsel %vm58, %v655, -1e+09
    %v660 = vsel %vm272, %v656, -inf
    %661 = vmax.xlane.f32.xlu0 %v660
    %v662 = vpop.xlane.xlu0 %661
    %v663 = vsel %vm272, %v657, -inf
    %664 = vmax.xlane.f32.xlu0 %v663
    %v665 = vpop.xlane.xlu0 %664
    %v666 = vsel %vm272, %v658, -inf
    %667 = vmax.xlane.f32.xlu0 %v666
    %v668 = vpop.xlane.xlu0 %667
    %v669 = vsel %vm272, %v659, -inf
    %670 = vmax.xlane.f32.xlu0 %v669
    %v671 = vpop.xlane.xlu0 %670
    %v672 = vsub.f32 %v656, %v662
    %v673 = vsub.f32 %v657, %v665
    %v674 = vsub.f32 %v658, %v668
    %v675 = vsub.f32 %v659, %v671
    %v676 = vmul.f32 %v672, 1.442695
    %v677 = vpow.pop %v676
    %v678 = vmul.f32 %v673, 1.442695
    %v679 = vpow.pop %v678
    %v680 = vmul.f32 %v674, 1.442695
    %v681 = vpow.pop %v680
    %v682 = vmul.f32 %v675, 1.442695
    %v683 = vpow.pop %v682
    %v684 = vsel %vm58, %v677, 0.0
    %v685 = vsel %vm58, %v679, 0.0
    %v686 = vsel %vm58, %v681, 0.0
    %v687 = vsel %vm58, %v683, 0.0
    %v688 = vsel %vm272, %v684, 0.0
    %689 = vadd.xlane.f32.xlu0 %v688
    %v690 = vpop.xlane.xlu0 %689
    %v691 = vsel %vm272, %v685, 0.0
    %692 = vadd.xlane.f32.xlu0 %v691
    %v693 = vpop.xlane.xlu0 %692
    %v694 = vsel %vm272, %v686, 0.0
    %695 = vadd.xlane.f32.xlu0 %v694
    %v696 = vpop.xlane.xlu0 %695
    %v697 = vsel %vm272, %v687, 0.0
    %698 = vadd.xlane.f32.xlu0 %v697
    %v699 = vpop.xlane.xlu0 %698
    %v700 = vmax.f32 %v690, 1e-09
    %v701 = vmax.f32 %v693, 1e-09
    %v702 = vmax.f32 %v696, 1e-09
    %v703 = vmax.f32 %v699, 1e-09
    %v704 = vrcp.pop %v700
    %v705 = vrcp.pop %v701
    %v706 = vrcp.pop %v702
    %v707 = vrcp.pop %v703
    %v708 = vmul.f32 %v684, %v704
    %v709 = vmul.f32 %v685, %v705
    %v710 = vmul.f32 %v686, %v706
    %v711 = vmul.f32 %v687, %v707
    %v712 = vpack.c.bf16 %v708, %v708
    %v713 = vpack.c.bf16 %v709, %v709
    %v714 = vpack.c.bf16 %v710, %v710
    %v715 = vpack.c.bf16 %v711, %v711
    %v717 = vsel %vm272, %v712, 0
    %v719 = vsel %vm332, %v484, 0
    %721 = vmatpush.bf16.msra.mxu0 0
    %722 = vmatpush.bf16.msra.mxu0 0
    %723 = vmatpush.bf16.msra.mxu0 0
    %724 = vmatpush.bf16.msra.mxu0 0
    %725 = vmatpush.bf16.msra.mxu0 0
    %726 = vmatpush.bf16.msra.mxu0 0
    %727 = vmatpush.bf16.msra.mxu0 0
    %728 = vmatpush.bf16.msra.mxu0 %v719
    %729 = vmatmul.bf16.gmra.mxu0 %v717
    %v730 = vpop.f32.mrf.mxu0
    %v731 = vadd.f32 0.0, %v730
    %v732 = vpop.f32.mrf.mxu0
    %733 = vdwg.mxu0
    %v735 = vsel %vm272, %v713, 0
    %737 = vmatpush.bf16.msra.mxu0 0
    %738 = vmatpush.bf16.msra.mxu0 0
    %739 = vmatpush.bf16.msra.mxu0 0
    %740 = vmatpush.bf16.msra.mxu0 0
    %741 = vmatpush.bf16.msra.mxu0 0
    %742 = vmatpush.bf16.msra.mxu0 0
    %743 = vmatpush.bf16.msra.mxu0 0
    %744 = vmatpush.bf16.msra.mxu0 %v719
    %745 = vmatmul.bf16.gmra.mxu0 %v735
    %v746 = vpop.f32.mrf.mxu0
    %v747 = vadd.f32 0.0, %v746
    %v748 = vpop.f32.mrf.mxu0
    %749 = vdwg.mxu0
    %v751 = vsel %vm272, %v714, 0
    %753 = vmatpush.bf16.msra.mxu0 0
    %754 = vmatpush.bf16.msra.mxu0 0
    %755 = vmatpush.bf16.msra.mxu0 0
    %756 = vmatpush.bf16.msra.mxu0 0
    %757 = vmatpush.bf16.msra.mxu0 0
    %758 = vmatpush.bf16.msra.mxu0 0
    %759 = vmatpush.bf16.msra.mxu0 0
    %760 = vmatpush.bf16.msra.mxu0 %v719
    %761 = vmatmul.bf16.gmra.mxu0 %v751
    %v762 = vpop.f32.mrf.mxu0
    %v763 = vadd.f32 0.0, %v762
    %v764 = vpop.f32.mrf.mxu0
    %765 = vdwg.mxu0
    %v767 = vsel %vm272, %v715, 0
    %769 = vmatpush.bf16.msra.mxu0 0
    %770 = vmatpush.bf16.msra.mxu0 0
    %771 = vmatpush.bf16.msra.mxu0 0
    %772 = vmatpush.bf16.msra.mxu0 0
    %773 = vmatpush.bf16.msra.mxu0 0
    %774 = vmatpush.bf16.msra.mxu0 0
    %775 = vmatpush.bf16.msra.mxu0 0
    %776 = vmatpush.bf16.msra.mxu0 %v719
    %777 = vmatmul.bf16.gmra.mxu0 %v767
    %v778 = vpop.f32.mrf.mxu0
    %v779 = vadd.f32 0.0, %v778
    %v780 = vpop.f32.mrf.mxu0
    %781 = vdwg.mxu0
    %v782 = vmul.f32 %v731, %v400
    %v783 = vmul.f32 %v747, %v401
    %v784 = vmul.f32 %v763, %v402
    %v785 = vmul.f32 %v779, %v403
    %v786 = vsel %vm96, %v782, 0.0
    %v787 = vsel %vm96, %v783, 0.0
    %v788 = vadd.f32 %v786, %v787
    %v789 = vsel %vm96, %v784, 0.0
    %v790 = vadd.f32 %v788, %v789
    %v791 = vsel %vm96, %v785, 0.0
    %v792 = vadd.f32 %v790, %v791
    %v794 = vperm.slane %v454, 0
    %v796 = vadd.f32 %v792, %v794
    %v797 = vxor.u32 %v796, 2147483648
    %v798 = vmul.f32 %v797, 1.442695
    %v799 = vpow.pop %v798
    %v800 = vadd.f32 %v799, 1.0
    %v801 = vrcp.pop %v800
    %v802 = vmul.f32 %v800, %v801
    %v803 = vsub.f32 1.0, %v802
    %v804 = vmul.f32 %v801, %v803
    %v805 = vadd.f32 %v801, %v804
    %vm806 = vweird.f32 %v800
    %vm807 = vweird.f32 %v801
    %vm808 = vmor %vm806, %vm807
    %v809 = vsel %vm808, %v801, %v805
    %v810 = vand.u32 2147483647, %v800
    %vm811 = vcmp.eq.f32.partialorder %v810, 8.507059e+37
    %v812 = vand.u32 %v800, 2147483648
    %v813 = vor.u32 1.1754944e-38, %v812
    %v814 = vsel %vm811, %v813, %v809
    %v815 = vmul.f32 1.0, %v814
    %v816 = vpack.c.bf16 %v815, %v815
    %v817 = vld [vmem:[%s11] sm:$0xf]
    %v818 = vld [vmem:[%s11 + $0x4] sm:$0xf]
    %v819 = vld [vmem:[%s11 + $0x8] sm:$0xf]
    %v820 = vld [vmem:[%s11 + $0xc] sm:$0xf]
    %v821 = vld [vmem:[%s12] sm:$0x1]
    %v823 = vperm.slane %v821, 0
    %v829 = vunpack.c.l.b16 %v817
    %v830 = vunpack.c.l.b16 %v818
    %v831 = vunpack.c.l.b16 %v819
    %v832 = vunpack.c.l.b16 %v820
    %v833 = vpack.c.b16 %v830, %v829
    %v834 = vpack.c.b16 %v832, %v831
    %v838 = vsel %vm96, %v816, 0
    %840 = vmatpush.bf16.msra.mxu0 0
    %841 = vmatpush.bf16.msra.mxu0 0
    %842 = vmatpush.bf16.msra.mxu0 0
    %843 = vmatpush.bf16.msra.mxu0 0
    %844 = vmatpush.bf16.msra.mxu0 0
    %845 = vmatpush.bf16.msra.mxu0 0
    %846 = vmatpush.bf16.msra.mxu0 %v834
    %847 = vmatpush.bf16.msra.mxu0 %v833
    %848 = vmatmul.bf16.gmra.mxu0 %v838
    %v849 = vpop.f32.mrf.mxu0
    %v850 = vadd.f32 %v823, %v849
    %v851 = vpop.f32.mrf.mxu0
    %852 = vdwg.mxu0
    %v853 = vmax.f32 %v850, 0.0
    %v854 = vpack.c.bf16 %v853, %v853
    %v855 = vld [vmem:[%s13] sm:$0xf]
    %v856 = vld [vmem:[%s13 + $0x4] sm:$0xf]
    %v857 = vld [vmem:[%s13 + $0x8] sm:$0xf]
    %v858 = vld [vmem:[%s13 + $0xc] sm:$0xf]
    %v859 = vld [vmem:[%s13 + $0x10] sm:$0xf]
    %v860 = vld [vmem:[%s13 + $0x14] sm:$0xf]
    %v861 = vld [vmem:[%s13 + $0x18] sm:$0xf]
    %v862 = vld [vmem:[%s13 + $0x1c] sm:$0xf]
    %v863 = vld [vmem:[%s13 + $0x20] sm:$0xf]
    %v864 = vld [vmem:[%s13 + $0x24] sm:$0xf]
    %v865 = vld [vmem:[%s13 + $0x28] sm:$0xf]
    %v866 = vld [vmem:[%s13 + $0x2c] sm:$0x7]
    %v867 = vld [vmem:[%s14] sm:$0x1]
    %v869 = vperm.slane %v867, 0
    %v883 = vunpack.c.l.b16 %v855
    %v884 = vunpack.c.l.b16 %v856
    %v885 = vunpack.c.l.b16 %v857
    %v886 = vunpack.c.l.b16 %v858
    %v887 = vunpack.c.l.b16 %v859
    %v888 = vunpack.c.l.b16 %v860
    %v889 = vunpack.c.l.b16 %v861
    %v890 = vunpack.c.l.b16 %v862
    %v891 = vunpack.c.l.b16 %v863
    %v892 = vunpack.c.l.b16 %v864
    %v893 = vunpack.c.l.b16 %v865
    %v894 = vunpack.c.l.b16 %v866
    %v895 = vpack.c.b16 %v884, %v883
    %v896 = vpack.c.b16 %v886, %v885
    %v897 = vpack.c.b16 %v888, %v887
    %v898 = vpack.c.b16 %v890, %v889
    %v899 = vpack.c.b16 %v892, %v891
    %v900 = vpack.c.b16 %v894, %v893
    %vm906 = vcmask 760832
    %v908 = vsel %vm906, %v854, 0
    %vm910 = vcmask 1045504
    %vm911 = vcmask 1046528
    %v912 = vsel %vm910, 4294967295, 65535
    %v913 = vsel %vm911, %v912, 0
    %v915 = vand.u32 %v900, %v913
    %917 = vmatpush.bf16.msra.mxu0 0
    %918 = vmatpush.bf16.msra.mxu0 0
    %919 = vmatpush.bf16.msra.mxu0 %v915
    %920 = vmatpush.bf16.msra.mxu0 %v899
    %921 = vmatpush.bf16.msra.mxu0 %v898
    %922 = vmatpush.bf16.msra.mxu0 %v897
    %923 = vmatpush.bf16.msra.mxu0 %v896
    %924 = vmatpush.bf16.msra.mxu0 %v895
    %925 = vmatmul.bf16.gmra.mxu0 %v908
    %v926 = vpop.f32.mrf.mxu0
    %v927 = vadd.f32 %v869, %v926
    %v928 = vpop.f32.mrf.mxu0
    %929 = vdwg.mxu0
    %930 = vst.msk [vmem:[#allocation2] sm:$0xff] %vm906, %v927
    // Predicated region
    $region62: #{generator_forward.1} parent=1 // pred_check
      _
    $region63: #{generator_forward.1} parent=1 // pred_check_branch
      %932 = sbr.rel (0) target = $region65
    $region64: #{generator_forward.1} parent=1 // pred_region
      %934 = vsyncadd [#allocation3], 0
      %s936 = sshll.u32 [#allocation2], 4
      %s937 = int_to_ptr.vmem [resolvable:$true] %s936
      %s938 = sshll.u32 %s15, 4
      %s939 = int_to_ptr.hbm [resolvable:$true] %s938
      %941 = dma.vmem_to_hbm [thread:$0]  %s937, 128, %s939, [#allocation3]
    $region65: #{generator_forward.1} parent=1 // pred_fallthru
      _
    // Predicated region
    $region66: #{generator_forward.1} parent=1 // pred_check
      _
    $region67: #{generator_forward.1} parent=1 // pred_check_branch
      %943 = sbr.rel (0) target = $region69
    $region68: #{generator_forward.1} parent=1 // pred_region
      %945 = dma.done [#allocation3], 128
    $region69: #{generator_forward.1} parent=1 // pred_fallthru
      _
    %946 = vsyncpa [#allocation3], 1

</llo_original>
